<compile_context>
chip_gen: v5e
topology: v5e:2x2
jax: 0.10.0
libtpu: 0.0.40
codegen_flags: <defaults>
</compile_context>

<pallas_src>
import functools
import math

import numpy as np

import jax
import jax.numpy as jnp
from jax.experimental import pallas as pl
from jax.experimental.pallas import tpu as pltpu


# --------------------------------------------------------------------------
# Kernel
# --------------------------------------------------------------------------
def _dequant_kernel(x_ref, w_ref, o_ref, *, inv_step):
    # x_ref: [TN, fold*L] bits (caller dtype), w_ref: [fold*L, fold*C] bf16.
    # Cast to bf16 in-kernel (bits and power-of-two weights are exact in
    # bf16), reduce on the MXU with f32 accumulation, fuse the affine
    # epilogue as a single multiply-add.
    x = x_ref[...].astype(jnp.bfloat16)
    num = jnp.dot(x, w_ref[...], preferred_element_type=jnp.float32)
    o_ref[...] = ((num + 0.5) * inv_step).astype(o_ref.dtype)


# --------------------------------------------------------------------------
# Weights: W[v*B + i, v] = 2**(B-1-i), scatter-free, cached as numpy.
# --------------------------------------------------------------------------
@functools.lru_cache(maxsize=None)
def _bit_weights_np(num_values: int, B: int) -> np.ndarray:
    bit_vals = (2.0 ** (B - 1 - np.arange(B))).astype(np.float32).reshape(B, 1)
    # Block-diagonal [num_values*B, num_values] matrix; kron is associative so
    # this already covers the batch-fold case (fold*C values).
    return np.kron(np.eye(num_values, dtype=np.float32), bit_vals)


# --------------------------------------------------------------------------
# Batch-fold factor: smallest fold with fold*C a multiple of 128 lanes.
# --------------------------------------------------------------------------
def _choose_fold(C: int, max_fold: int = 32) -> int:
    if C % 128 == 0:
        return 1
    f = 128 // math.gcd(C, 128)
    return f if f <= max_fold else 1


# --------------------------------------------------------------------------
# Tile-row choice: VMEM-budget driven, v7x-safe, >=2 grid steps when possible.
# --------------------------------------------------------------------------
def _choose_tile_rows(num_rows: int, in_row_bytes: int, out_row_bytes: int,
                      w_bytes: int, budget_bytes: int = 24 * 1024 * 1024) -> int:
    # Double-buffered input tile + double-buffered output tile + (double-
    # buffered) resident weights must fit the budget.
    per_row = 2 * in_row_bytes + 2 * out_row_bytes
    avail = max(budget_bytes - 2 * w_bytes, 8 * per_row)
    tn = int(avail // per_row)
    tn -= tn % 8
    tn = max(tn, 8)
    if num_rows <= 8:
        return num_rows  # single block; block dims == full array dims is legal
    # Cap at ~half the rows (rounded to a sublane multiple) so there are at
    # least 2 grid steps -> both v7x TensorCores get work via "parallel".
    half = -(-num_rows // 2)
    half = ((half + 7) // 8) * 8
    return max(8, min(tn, half))


# --------------------------------------------------------------------------
# Wrapper
# --------------------------------------------------------------------------
def dequantization_layer(x: jnp.ndarray, B: int,
                         out_dtype=jnp.float32) -> jnp.ndarray:
    """x: [N, C*B] bits (0/1, any dtype incl. int8) -> [N, C] dequantized."""
    N, L = x.shape
    assert L % B == 0, "feature dim must be a multiple of B"
    C = L // B
    inv_step = 1.0 / float(2 ** B)

    # Fold batch rows into the feature axis so the output is lane-dense.
    fold = _choose_fold(C)
    pad = (-N) % fold
    if pad:
        x = jnp.pad(x, ((0, pad), (0, 0)))
    n_pad = N + pad
    n_rows = n_pad // fold
    l4 = fold * L
    c4 = fold * C

    x4 = x.reshape(n_rows, l4)                       # contiguous, free
    w = jnp.asarray(_bit_weights_np(c4, B), dtype=jnp.bfloat16)  # [l4, c4]

    out_itemsize = jnp.dtype(out_dtype).itemsize
    tn = _choose_tile_rows(n_rows,
                           l4 * x.dtype.itemsize,
                           c4 * out_itemsize,
                           l4 * c4 * 2)
    grid = (pl.cdiv(n_rows, tn),)

    kernel = functools.partial(_dequant_kernel, inv_step=inv_step)

    out4 = pl.pallas_call(
        kernel,
        out_shape=jax.ShapeDtypeStruct((n_rows, c4), out_dtype),
        grid_spec=pltpu.PrefetchScalarGridSpec(
            num_scalar_prefetch=0,
            grid=grid,
            in_specs=[
                # Streaming (folded) batch tile of bits.
                pl.BlockSpec((tn, l4), lambda i: (i, 0)),
                # Bit-weight matrix, resident across all grid steps.
                pl.BlockSpec((l4, c4), lambda i: (0, 0)),
            ],
            out_specs=pl.BlockSpec((tn, c4), lambda i: (i, 0)),
        ),
        compiler_params=pltpu.CompilerParams(
            dimension_semantics=("parallel",),
            vmem_limit_bytes=32 * 1024 * 1024,
        ),
    )(x4, w)

    out = out4.reshape(n_pad, C)                     # contiguous, free
    if pad:
        out = out[:N]
    return out


# --------------------------------------------------------------------------
# Pure-JAX reference (mirror of PyTorch Bit2Num / Dequantization forward)
# --------------------------------------------------------------------------
def dequantization_reference(x: jnp.ndarray, B: int) -> jnp.ndarray:
    N, L = x.shape
    C = L // B
    step = 2.0 ** B
    xb = x.astype(jnp.float32).reshape(N, C, B)
    weights = (2.0 ** (B - 1 - jnp.arange(B))).astype(jnp.float32)
    num = jnp.sum(xb * weights[None, None, :], axis=-1)
    return (num + 0.5) / step


if __name__ == "__main__":
    B = 4                    # bits per value (Decoder default)
    feedback_bits = 128      # Decoder default -> L = 128
    L = feedback_bits
    C = L // B               # 32 dequantized features (fc input width)
    N = 8                    # small batch

    key = jax.random.PRNGKey(0)
    # Bits arrive as int8 (not f32): ~4x less HBM traffic for this HBM-bound
    # op; the kernel casts to bf16 internally (exact for 0/1 bits).
    bits = jax.random.bernoulli(key, p=0.5, shape=(N, L)).astype(jnp.int8)

    out = jax.block_until_ready(dequantization_layer(bits, B))
    ref = dequantization_reference(bits, B)

    assert out.shape == (N, C)
    assert jnp.allclose(out, ref, atol=1e-6, rtol=0.0), "mismatch vs reference"

    print("KERNEL_OK")
</pallas_src>

<mosaic_0001>
module attributes {stable_mosaic.version = 11 : i64} {
  func.func @_dequant_kernel(%arg0: i32, %arg1: memref<2x512xi8, #tpu.memory_space<vmem>>, %arg2: memref<512x128xbf16, #tpu.memory_space<vmem>>, %arg3: memref<2x128xf32, #tpu.memory_space<vmem>>) attributes {dimension_semantics = [#tpu.dimension_semantics<parallel>], iteration_bounds = array<i64: 1>, scalar_prefetch = 0 : i64, scratch_operands = 0 : i64, tpu.core_type = #tpu.core_type<tc>, window_params = [{transform_indices = @transform_0, window_bounds = array<i64: 2, 512>}, {pipeline_mode = #tpu.pipeline_mode<synchronous>, transform_indices = @transform_1, window_bounds = array<i64: 512, 128>}, {transform_indices = @transform_2, window_bounds = array<i64: 2, 128>}]} {
    %c0 = arith.constant 0 : index
    %c0_0 = arith.constant 0 : index
    %0 = vector.load %arg1[%c0, %c0_0] : memref<2x512xi8, #tpu.memory_space<vmem>>, vector<2x512xi8>
    %1 = arith.sitofp %0 : vector<2x512xi8> to vector<2x512xbf16>
    %c0_1 = arith.constant 0 : index
    %c0_2 = arith.constant 0 : index
    %2 = vector.load %arg2[%c0_1, %c0_2] : memref<512x128xbf16, #tpu.memory_space<vmem>>, vector<512x128xbf16>
    %cst = arith.constant dense<0.000000e+00> : vector<2x128xf32>
    %3 = tpu.matmul %1, %2, %cst {dimension_numbers = #tpu.dot_dimension_numbers<[1], [0], [0], [1], [0, 0, 1, 1], [], []>} : vector<2x512xbf16>, vector<512x128xbf16>, vector<2x128xf32> -> vector<2x128xf32>
    %cst_3 = arith.constant 5.000000e-01 : f32
    %4 = vector.broadcast %cst_3 : f32 to vector<2x128xf32>
    %5 = arith.addf %3, %4 : vector<2x128xf32>
    %cst_4 = arith.constant 6.250000e-02 : f32
    %6 = vector.broadcast %cst_4 : f32 to vector<2x128xf32>
    %7 = arith.mulf %5, %6 : vector<2x128xf32>
    %c0_5 = arith.constant 0 : index
    %c0_6 = arith.constant 0 : index
    %8 = vector.load %arg3[%c0_5, %c0_6] : memref<2x128xf32, #tpu.memory_space<vmem>>, vector<2x128xf32>
    tpu.vector_store %arg3[%c0_5, %c0_6], %7 {strides = array<i32>} : memref<2x128xf32, #tpu.memory_space<vmem>>, vector<2x128xf32>,
    return
  }
  func.func @transform_0(%arg0: i32) -> (i32, i32) {
    %c0_i32 = arith.constant 0 : i32
    %c0_i32_0 = arith.constant 0 : i32
    return %arg0, %c0_i32 : i32, i32
  }
  func.func @transform_1(%arg0: i32) -> (i32, i32) {
    %c0_i32 = arith.constant 0 : i32
    %c0_i32_0 = arith.constant 0 : i32
    %c0_i32_1 = arith.constant 0 : i32
    return %c0_i32, %c0_i32_0 : i32, i32
  }
  func.func @transform_2(%arg0: i32) -> (i32, i32) {
    %c0_i32 = arith.constant 0 : i32
    %c0_i32_0 = arith.constant 0 : i32
    return %arg0, %c0_i32 : i32, i32
  }
}

</mosaic_0001>

<llo_original>
// kernel: tpu_custom_call.1
$region0: #{tpu_custom_call.1}
  #allocation0 [shape = 'u32[]', space=smem, size = 0x4, offset = 0x4, fixed_abs, tag = 'smem constant byte address 0x4 - core index']
  #allocation1 [shape = 'u32[72,128]{1,0:T(1,128)}', space=vmem, size = 0x9000, scoped, tag = 'internal scratch']
  %s0 = inlined_call_operand.hbm [shape: s8[2,512], index: 0, kind: input, shape index: {}]
  %s1 = inlined_call_operand.hbm [shape: bf16[512,128], index: 1, kind: input, shape index: {}]
  %s2 = inlined_call_operand.hbm [shape: f32[2,128], index: 2, kind: output, shape index: {}]
  %s3 = sld [smem:[#allocation0]]
  $region26: #{tpu_custom_call.1} parent=0
    _
  %s5 = ssub.s32 1, %s3
  %s6 = scalar_select 0, %s5, %s3
  $region1: #{tpu_custom_call.1} parent=0
    #allocation2 [shape = 'u8[2048]{0}', space=vmem, size = 0x800, scoped, tag = 'input window, operand 0, single buffered']
    #allocation3 [shape = 's32[1]{0}', space=sflag, size = 0x4, scoped, tag = 'scoped memory for tpu_custom_call.1']
    #allocation4 [shape = 's32[1]{0}', space=sflag, size = 0x4, scoped, tag = 'scoped memory for tpu_custom_call.1']
    #allocation5 [shape = 'u8[131072]{0}', space=vmem, size = 0x20000, scoped, tag = 'input window, operand 1, single buffered']
    #allocation6 [shape = 's32[1]{0}', space=sflag, size = 0x4, scoped, tag = 'scoped memory for tpu_custom_call.1']
    #allocation7 [shape = 'u8[1024]{0}', space=vmem, size = 0x400, scoped, tag = 'output window, operand 0, single buffered']
    %7 = vsyncpa [#allocation3], 0
    %8 = vsyncpa [#allocation6], 0
    %9 = vsyncpa [#allocation4], 0
    // Predicated region
    $region2: #{tpu_custom_call.1} parent=1 // pred_check
      _
    $region3: #{tpu_custom_call.1} parent=1 // pred_check_branch
      %11 = sbr.rel (0) target = $region5
    $region4: #{tpu_custom_call.1} parent=1 // pred_region
      %13 = vsyncadd [#allocation3], 0
      %s15 = sshll.u32 %s0, 4
      %s16 = int_to_ptr.hbm [resolvable:$true] %s15
      %s17 = sshll.u32 [#allocation2], 4
      %s18 = int_to_ptr.vmem [resolvable:$true] %s17
      %20 = dma.hbm_to_vmem [thread:$0]  %s16, 64, %s18, [#allocation3]
    $region5: #{tpu_custom_call.1} parent=1 // pred_fallthru
      _
    // Predicated region
    $region6: #{tpu_custom_call.1} parent=1 // pred_check
      _
    $region7: #{tpu_custom_call.1} parent=1 // pred_check_branch
      %22 = sbr.rel (0) target = $region9
    $region8: #{tpu_custom_call.1} parent=1 // pred_region
      %24 = vsyncadd [#allocation6], 0
      %s25 = sshll.u32 %s1, 4
      %s26 = int_to_ptr.hbm [resolvable:$true] %s25
      %s27 = sshll.u32 [#allocation5], 4
      %s28 = int_to_ptr.vmem [resolvable:$true] %s27
      %33 = dma.hbm_to_vmem [thread:$0]  %s26, 4096, %s28, [#allocation6], 64, 64, 4
    $region9: #{tpu_custom_call.1} parent=1 // pred_fallthru
      _
    // Predicated region
    $region10: #{tpu_custom_call.1} parent=1 // pred_check
      _
    $region11: #{tpu_custom_call.1} parent=1 // pred_check_branch
      %35 = sbr.rel (0) target = $region13
    $region12: #{tpu_custom_call.1} parent=1 // pred_region
      %37 = dma.done [#allocation3], 64
    $region13: #{tpu_custom_call.1} parent=1 // pred_fallthru
      _
    // Predicated region
    $region14: #{tpu_custom_call.1} parent=1 // pred_check
      _
    $region15: #{tpu_custom_call.1} parent=1 // pred_check_branch
      %39 = sbr.rel (0) target = $region17
    $region16: #{tpu_custom_call.1} parent=1 // pred_region
      %41 = dma.done [#allocation6], 4096
    $region17: #{tpu_custom_call.1} parent=1 // pred_fallthru
      _
    %v42 = vld [vmem:[#allocation2] sm:$0xf]
    %v43 = vunpack.c.0.s8 %v42
    %v44 = vunpack.c.1.s8 %v42
    %v45 = vcvt.s32.f32 %v43
    %v46 = vcvt.s32.f32 %v44
    %49 = vst [vmem:[#allocation1] ss:$2 sm:$0xff] %v45
    %s50 = scalar_lea.vmem [#allocation1], 16
    %51 = vst [vmem:[%s50] ss:$2 sm:$0xff] %v46
    %v52 = vld.sshfl [vmem:[#allocation1] sm:$0xff pattern:$0x75316420]
    %v53 = vld.sshfl [vmem:[#allocation1 + $0x8] sm:$0xff pattern:$0x75316420]
    %v54 = vld.sshfl [vmem:[#allocation1 + $0x10] sm:$0xff pattern:$0x75316420]
    %v55 = vld.sshfl [vmem:[#allocation1 + $0x18] sm:$0xff pattern:$0x75316420]
    %v60 = vpack.c.bf16 %v52, %v52
    %v61 = vpack.c.bf16 %v53, %v53
    %v62 = vpack.c.bf16 %v54, %v54
    %v63 = vpack.c.bf16 %v55, %v55
    %v64 = vld [vmem:[#allocation5] sm:$0xf]
    %v65 = vld [vmem:[#allocation5 + $0x4] sm:$0xf]
    %v66 = vld [vmem:[#allocation5 + $0x8] sm:$0xf]
    %v67 = vld [vmem:[#allocation5 + $0xc] sm:$0xf]
    %v68 = vld [vmem:[#allocation5 + $0x10] sm:$0xf]
    %v69 = vld [vmem:[#allocation5 + $0x14] sm:$0xf]
    %v70 = vld [vmem:[#allocation5 + $0x18] sm:$0xf]
    %v71 = vld [vmem:[#allocation5 + $0x1c] sm:$0xf]
    %v72 = vld [vmem:[#allocation5 + $0x20] sm:$0xf]
    %v73 = vld [vmem:[#allocation5 + $0x24] sm:$0xf]
    %v74 = vld [vmem:[#allocation5 + $0x28] sm:$0xf]
    %v75 = vld [vmem:[#allocation5 + $0x2c] sm:$0xf]
    %v76 = vld [vmem:[#allocation5 + $0x30] sm:$0xf]
    %v77 = vld [vmem:[#allocation5 + $0x34] sm:$0xf]
    %v78 = vld [vmem:[#allocation5 + $0x38] sm:$0xf]
    %v79 = vld [vmem:[#allocation5 + $0x3c] sm:$0xf]
    %v80 = vld [vmem:[#allocation5 + $0x40] sm:$0xf]
    %v81 = vld [vmem:[#allocation5 + $0x44] sm:$0xf]
    %v82 = vld [vmem:[#allocation5 + $0x48] sm:$0xf]
    %v83 = vld [vmem:[#allocation5 + $0x4c] sm:$0xf]
    %v84 = vld [vmem:[#allocation5 + $0x50] sm:$0xf]
    %v85 = vld [vmem:[#allocation5 + $0x54] sm:$0xf]
    %v86 = vld [vmem:[#allocation5 + $0x58] sm:$0xf]
    %v87 = vld [vmem:[#allocation5 + $0x5c] sm:$0xf]
    %v88 = vld [vmem:[#allocation5 + $0x60] sm:$0xf]
    %v89 = vld [vmem:[#allocation5 + $0x64] sm:$0xf]
    %v90 = vld [vmem:[#allocation5 + $0x68] sm:$0xf]
    %v91 = vld [vmem:[#allocation5 + $0x6c] sm:$0xf]
    %v92 = vld [vmem:[#allocation5 + $0x70] sm:$0xf]
    %v93 = vld [vmem:[#allocation5 + $0x74] sm:$0xf]
    %v94 = vld [vmem:[#allocation5 + $0x78] sm:$0xf]
    %v95 = vld [vmem:[#allocation5 + $0x7c] sm:$0xf]
    %v96 = vld [vmem:[#allocation5 + $0x80] sm:$0xf]
    %v97 = vld [vmem:[#allocation5 + $0x84] sm:$0xf]
    %v98 = vld [vmem:[#allocation5 + $0x88] sm:$0xf]
    %v99 = vld [vmem:[#allocation5 + $0x8c] sm:$0xf]
    %v100 = vld [vmem:[#allocation5 + $0x90] sm:$0xf]
    %v101 = vld [vmem:[#allocation5 + $0x94] sm:$0xf]
    %v102 = vld [vmem:[#allocation5 + $0x98] sm:$0xf]
    %v103 = vld [vmem:[#allocation5 + $0x9c] sm:$0xf]
    %v104 = vld [vmem:[#allocation5 + $0xa0] sm:$0xf]
    %v105 = vld [vmem:[#allocation5 + $0xa4] sm:$0xf]
    %v106 = vld [vmem:[#allocation5 + $0xa8] sm:$0xf]
    %v107 = vld [vmem:[#allocation5 + $0xac] sm:$0xf]
    %v108 = vld [vmem:[#allocation5 + $0xb0] sm:$0xf]
    %v109 = vld [vmem:[#allocation5 + $0xb4] sm:$0xf]
    %v110 = vld [vmem:[#allocation5 + $0xb8] sm:$0xf]
    %v111 = vld [vmem:[#allocation5 + $0xbc] sm:$0xf]
    %v112 = vld [vmem:[#allocation5 + $0xc0] sm:$0xf]
    %v113 = vld [vmem:[#allocation5 + $0xc4] sm:$0xf]
    %v114 = vld [vmem:[#allocation5 + $0xc8] sm:$0xf]
    %v115 = vld [vmem:[#allocation5 + $0xcc] sm:$0xf]
    %v116 = vld [vmem:[#allocation5 + $0xd0] sm:$0xf]
    %v117 = vld [vmem:[#allocation5 + $0xd4] sm:$0xf]
    %v118 = vld [vmem:[#allocation5 + $0xd8] sm:$0xf]
    %v119 = vld [vmem:[#allocation5 + $0xdc] sm:$0xf]
    %v120 = vld [vmem:[#allocation5 + $0xe0] sm:$0xf]
    %v121 = vld [vmem:[#allocation5 + $0xe4] sm:$0xf]
    %v122 = vld [vmem:[#allocation5 + $0xe8] sm:$0xf]
    %v123 = vld [vmem:[#allocation5 + $0xec] sm:$0xf]
    %v124 = vld [vmem:[#allocation5 + $0xf0] sm:$0xf]
    %v125 = vld [vmem:[#allocation5 + $0xf4] sm:$0xf]
    %v126 = vld [vmem:[#allocation5 + $0xf8] sm:$0xf]
    %v127 = vld [vmem:[#allocation5 + $0xfc] sm:$0xf]
    %v192 = vunpack.c.l.b16 %v64
    %v193 = vunpack.c.l.b16 %v65
    %v194 = vunpack.c.l.b16 %v66
    %v195 = vunpack.c.l.b16 %v67
    %v196 = vunpack.c.l.b16 %v68
    %v197 = vunpack.c.l.b16 %v69
    %v198 = vunpack.c.l.b16 %v70
    %v199 = vunpack.c.l.b16 %v71
    %v200 = vunpack.c.l.b16 %v72
    %v201 = vunpack.c.l.b16 %v73
    %v202 = vunpack.c.l.b16 %v74
    %v203 = vunpack.c.l.b16 %v75
    %v204 = vunpack.c.l.b16 %v76
    %v205 = vunpack.c.l.b16 %v77
    %v206 = vunpack.c.l.b16 %v78
    %v207 = vunpack.c.l.b16 %v79
    %v208 = vunpack.c.l.b16 %v80
    %v209 = vunpack.c.l.b16 %v81
    %v210 = vunpack.c.l.b16 %v82
    %v211 = vunpack.c.l.b16 %v83
    %v212 = vunpack.c.l.b16 %v84
    %v213 = vunpack.c.l.b16 %v85
    %v214 = vunpack.c.l.b16 %v86
    %v215 = vunpack.c.l.b16 %v87
    %v216 = vunpack.c.l.b16 %v88
    %v217 = vunpack.c.l.b16 %v89
    %v218 = vunpack.c.l.b16 %v90
    %v219 = vunpack.c.l.b16 %v91
    %v220 = vunpack.c.l.b16 %v92
    %v221 = vunpack.c.l.b16 %v93
    %v222 = vunpack.c.l.b16 %v94
    %v223 = vunpack.c.l.b16 %v95
    %v224 = vunpack.c.l.b16 %v96
    %v225 = vunpack.c.l.b16 %v97
    %v226 = vunpack.c.l.b16 %v98
    %v227 = vunpack.c.l.b16 %v99
    %v228 = vunpack.c.l.b16 %v100
    %v229 = vunpack.c.l.b16 %v101
    %v230 = vunpack.c.l.b16 %v102
    %v231 = vunpack.c.l.b16 %v103
    %v232 = vunpack.c.l.b16 %v104
    %v233 = vunpack.c.l.b16 %v105
    %v234 = vunpack.c.l.b16 %v106
    %v235 = vunpack.c.l.b16 %v107
    %v236 = vunpack.c.l.b16 %v108
    %v237 = vunpack.c.l.b16 %v109
    %v238 = vunpack.c.l.b16 %v110
    %v239 = vunpack.c.l.b16 %v111
    %v240 = vunpack.c.l.b16 %v112
    %v241 = vunpack.c.l.b16 %v113
    %v242 = vunpack.c.l.b16 %v114
    %v243 = vunpack.c.l.b16 %v115
    %v244 = vunpack.c.l.b16 %v116
    %v245 = vunpack.c.l.b16 %v117
    %v246 = vunpack.c.l.b16 %v118
    %v247 = vunpack.c.l.b16 %v119
    %v248 = vunpack.c.l.b16 %v120
    %v249 = vunpack.c.l.b16 %v121
    %v250 = vunpack.c.l.b16 %v122
    %v251 = vunpack.c.l.b16 %v123
    %v252 = vunpack.c.l.b16 %v124
    %v253 = vunpack.c.l.b16 %v125
    %v254 = vunpack.c.l.b16 %v126
    %v255 = vunpack.c.l.b16 %v127
    %v256 = vpack.c.b16 %v193, %v192
    %v257 = vpack.c.b16 %v195, %v194
    %v258 = vpack.c.b16 %v197, %v196
    %v259 = vpack.c.b16 %v199, %v198
    %v260 = vpack.c.b16 %v201, %v200
    %v261 = vpack.c.b16 %v203, %v202
    %v262 = vpack.c.b16 %v205, %v204
    %v263 = vpack.c.b16 %v207, %v206
    %v264 = vpack.c.b16 %v209, %v208
    %v265 = vpack.c.b16 %v211, %v210
    %v266 = vpack.c.b16 %v213, %v212
    %v267 = vpack.c.b16 %v215, %v214
    %v268 = vpack.c.b16 %v217, %v216
    %v269 = vpack.c.b16 %v219, %v218
    %v270 = vpack.c.b16 %v221, %v220
    %v271 = vpack.c.b16 %v223, %v222
    %v272 = vpack.c.b16 %v225, %v224
    %v273 = vpack.c.b16 %v227, %v226
    %v274 = vpack.c.b16 %v229, %v228
    %v275 = vpack.c.b16 %v231, %v230
    %v276 = vpack.c.b16 %v233, %v232
    %v277 = vpack.c.b16 %v235, %v234
    %v278 = vpack.c.b16 %v237, %v236
    %v279 = vpack.c.b16 %v239, %v238
    %v280 = vpack.c.b16 %v241, %v240
    %v281 = vpack.c.b16 %v243, %v242
    %v282 = vpack.c.b16 %v245, %v244
    %v283 = vpack.c.b16 %v247, %v246
    %v284 = vpack.c.b16 %v249, %v248
    %v285 = vpack.c.b16 %v251, %v250
    %v286 = vpack.c.b16 %v253, %v252
    %v287 = vpack.c.b16 %v255, %v254
    %320 = vmatpush.bf16.msra.mxu0 %v263
    %321 = vmatpush.bf16.msra.mxu0 %v262
    %322 = vmatpush.bf16.msra.mxu0 %v261
    %323 = vmatpush.bf16.msra.mxu0 %v260
    %324 = vmatpush.bf16.msra.mxu0 %v259
    %325 = vmatpush.bf16.msra.mxu0 %v258
    %326 = vmatpush.bf16.msra.mxu0 %v257
    %327 = vmatpush.bf16.msra.mxu0 %v256
    %328 = vmatmul.bf16.gmra.mxu0 %v60
    %v329 = vpop.f32.mrf.mxu0
    %v330 = vadd.f32 0.5, %v329
    %v331 = vpop.f32.mrf.mxu0
    %332 = vdwg.mxu0
    %333 = vmatpush.bf16.msra.mxu0 %v271
    %334 = vmatpush.bf16.msra.mxu0 %v270
    %335 = vmatpush.bf16.msra.mxu0 %v269
    %336 = vmatpush.bf16.msra.mxu0 %v268
    %337 = vmatpush.bf16.msra.mxu0 %v267
    %338 = vmatpush.bf16.msra.mxu0 %v266
    %339 = vmatpush.bf16.msra.mxu0 %v265
    %340 = vmatpush.bf16.msra.mxu0 %v264
    %341 = vmatmul.bf16.gmra.mxu0 %v61
    %v342 = vpop.f32.mrf.mxu0
    %v343 = vadd.f32 %v330, %v342
    %v344 = vpop.f32.mrf.mxu0
    %345 = vdwg.mxu0
    %346 = vmatpush.bf16.msra.mxu0 %v279
    %347 = vmatpush.bf16.msra.mxu0 %v278
    %348 = vmatpush.bf16.msra.mxu0 %v277
    %349 = vmatpush.bf16.msra.mxu0 %v276
    %350 = vmatpush.bf16.msra.mxu0 %v275
    %351 = vmatpush.bf16.msra.mxu0 %v274
    %352 = vmatpush.bf16.msra.mxu0 %v273
    %353 = vmatpush.bf16.msra.mxu0 %v272
    %354 = vmatmul.bf16.gmra.mxu0 %v62
    %v355 = vpop.f32.mrf.mxu0
    %v356 = vadd.f32 %v343, %v355
    %v357 = vpop.f32.mrf.mxu0
    %358 = vdwg.mxu0
    %359 = vmatpush.bf16.msra.mxu0 %v287
    %360 = vmatpush.bf16.msra.mxu0 %v286
    %361 = vmatpush.bf16.msra.mxu0 %v285
    %362 = vmatpush.bf16.msra.mxu0 %v284
    %363 = vmatpush.bf16.msra.mxu0 %v283
    %364 = vmatpush.bf16.msra.mxu0 %v282
    %365 = vmatpush.bf16.msra.mxu0 %v281
    %366 = vmatpush.bf16.msra.mxu0 %v280
    %367 = vmatmul.bf16.gmra.mxu0 %v63
    %v368 = vpop.f32.mrf.mxu0
    %v369 = vadd.f32 %v356, %v368
    %v370 = vpop.f32.mrf.mxu0
    %371 = vdwg.mxu0
    %v372 = vmul.f32 %v369, 0.0625
    %373 = vst [vmem:[#allocation7] sm:$0x3] %v372
    // Predicated region
    $region18: #{tpu_custom_call.1} parent=1 // pred_check
      _
    $region19: #{tpu_custom_call.1} parent=1 // pred_check_branch
      %375 = sbr.rel (0) target = $region21
    $region20: #{tpu_custom_call.1} parent=1 // pred_region
      %377 = vsyncadd [#allocation4], 0
      %s379 = sshll.u32 [#allocation7], 4
      %s380 = int_to_ptr.vmem [resolvable:$true] %s379
      %s381 = sshll.u32 %s2, 4
      %s382 = int_to_ptr.hbm [resolvable:$true] %s381
      %384 = dma.vmem_to_hbm [thread:$0]  %s380, 32, %s382, [#allocation4]
    $region21: #{tpu_custom_call.1} parent=1 // pred_fallthru
      _
    // Predicated region
    $region22: #{tpu_custom_call.1} parent=1 // pred_check
      _
    $region23: #{tpu_custom_call.1} parent=1 // pred_check_branch
      %386 = sbr.rel (0) target = $region25
    $region24: #{tpu_custom_call.1} parent=1 // pred_region
      %388 = dma.done [#allocation4], 32
    $region25: #{tpu_custom_call.1} parent=1 // pred_fallthru
      _
    %389 = vsyncpa [#allocation3], 1
    %390 = vsyncpa [#allocation6], 1
    %391 = vsyncpa [#allocation4], 1

</llo_original>
